<compile_context>
chip_gen: v7x
topology: tpu7x:2x2x1
jax: 0.10.0
libtpu: 0.0.40
codegen_flags: <defaults>
</compile_context>

<pallas_src>
import jax
import jax.numpy as jnp
from jax.experimental import pallas as pl
from jax.experimental.pallas import tpu as pltpu


def _dual_se_kernel(x_ref, w1se_ref, w2se_ref, w1d_ref, w2d_ref, w3d_ref, o_ref):
    """One batch-block: (BT, C, L) in, (BT, C, L) out. Weights pre-transposed."""
    x = x_ref[...]                                    # (BT, C, L), native dtype
    # Per-channel mean over L, accumulated in f32 (cast fuses into the reduce).
    xm = jnp.mean(x.astype(jnp.float32), axis=2)      # (BT, C)

    # SE branch: fc1_se -> relu -> fc2_se -> sigmoid.
    h_se = jnp.dot(xm, w1se_ref[...], preferred_element_type=jnp.float32)
    h_se = jnp.maximum(h_se, 0.0)                     # (BT, Cr)
    y_se = jax.nn.sigmoid(
        jnp.dot(h_se, w2se_ref[...], preferred_element_type=jnp.float32))  # (BT, C)

    # Dual branch: fc1_dual -> relu -> fc2_dual -> relu -> fc3_dual -> sigmoid.
    h_d = jnp.dot(xm, w1d_ref[...], preferred_element_type=jnp.float32)
    h_d = jnp.maximum(h_d, 0.0)                       # (BT, Cr)
    h_d = jnp.dot(h_d, w2d_ref[...], preferred_element_type=jnp.float32)
    h_d = jnp.maximum(h_d, 0.0)                       # (BT, C/2)
    y_d = jax.nn.sigmoid(
        jnp.dot(h_d, w3d_ref[...], preferred_element_type=jnp.float32))    # (BT, C)

    # out = x * y_se + x * y_dual == x * (y_se + y_dual), broadcast over L.
    gate = (y_se + y_d).astype(x.dtype)[:, :, None]   # (BT, C, 1)
    o_ref[...] = x * gate


def _pick_batch_tile(B, C, L, itemsize):
    """Largest batch tile whose in+out double-buffered blocks fit the budget."""
    per_batch = C * L * itemsize
    # in block + out block, each double-buffered => ~4 live copies per step;
    # keep them under ~24 MiB of the 32 MiB scoped-VMEM limit we request.
    max_bt = max(1, (24 << 20) // (4 * per_batch))
    bt = int(min(B, max_bt))
    # Keep >= 2 grid steps for v7x's two TensorCores when the batch is big
    # enough for the split to matter.
    if bt >= B and B >= 16:
        bt = -(-B // 2)
    return max(1, bt)


def dual_se_block(x, w1_se, w2_se, w1_dual, w2_dual, w3_dual):
    """Pallas DualSEBlock.forward. x: (B, C, L); weights in nn.Linear layout."""
    B, C, L = x.shape
    Cr = w1_se.shape[0]
    C2 = w2_dual.shape[0]
    x_itemsize = jnp.dtype(x.dtype).itemsize

    # Transpose the weights once in the wrapper so the kernel never does.
    w1_se_t = w1_se.T        # (C, Cr)
    w2_se_t = w2_se.T        # (Cr, C)
    w1_dual_t = w1_dual.T    # (C, Cr)
    w2_dual_t = w2_dual.T    # (Cr, C2)
    w3_dual_t = w3_dual.T    # (C2, C)

    bt = _pick_batch_tile(B, C, L, x_itemsize)
    grid = (pl.cdiv(B, bt),)

    const = lambda shape: pl.BlockSpec(shape, lambda b: (0,) * len(shape))

    w_itemsize = jnp.dtype(w1_se.dtype).itemsize
    w_bytes = (w1_se.size + w2_se.size + w1_dual.size + w2_dual.size
               + w3_dual.size) * w_itemsize
    cost = pl.CostEstimate(
        flops=2 * B * (2 * C * Cr + Cr * C + Cr * C2 + C2 * C) + 3 * B * C * L,
        transcendentals=2 * B * C,
        bytes_accessed=2 * B * C * L * x_itemsize + w_bytes,
    )

    return pl.pallas_call(
        _dual_se_kernel,
        out_shape=jax.ShapeDtypeStruct((B, C, L), x.dtype),
        grid_spec=pltpu.PrefetchScalarGridSpec(
            num_scalar_prefetch=0,
            grid=grid,
            in_specs=[
                pl.BlockSpec((bt, C, L), lambda b: (b, 0, 0)),
                const((C, Cr)),    # fc1_se.weight.T
                const((Cr, C)),    # fc2_se.weight.T
                const((C, Cr)),    # fc1_dual.weight.T
                const((Cr, C2)),   # fc2_dual.weight.T
                const((C2, C)),    # fc3_dual.weight.T
            ],
            out_specs=pl.BlockSpec((bt, C, L), lambda b: (b, 0, 0)),
        ),
        compiler_params=pltpu.CompilerParams(
            dimension_semantics=("parallel",),
            vmem_limit_bytes=32 * 1024 * 1024,
        ),
        cost_estimate=cost,
    )(x, w1_se_t, w2_se_t, w1_dual_t, w2_dual_t, w3_dual_t)


def _reference(x, w1_se, w2_se, w1_dual, w2_dual, w3_dual):
    xm = jnp.mean(x, axis=2)
    y_se = jax.nn.sigmoid(jnp.maximum(xm @ w1_se.T, 0.0) @ w2_se.T)[:, :, None]
    h = jnp.maximum(xm @ w1_dual.T, 0.0)
    h = jnp.maximum(h @ w2_dual.T, 0.0)
    y_d = jax.nn.sigmoid(h @ w3_dual.T)[:, :, None]
    return x * y_se + x * y_d


if __name__ == "__main__":
    # Small shapes consistent with the module: channel divisible by
    # reduction (16) and by 2.
    B, C, L = 2, 32, 16
    reduction = 16
    Cr, C2 = C // reduction, C // 2

    key = jax.random.PRNGKey(0)
    ks = jax.random.split(key, 6)
    x = jax.random.normal(ks[0], (B, C, L), dtype=jnp.float32)
    # nn.Linear weight layout: (out_features, in_features), bias=False.
    w1_se = jax.random.normal(ks[1], (Cr, C), dtype=jnp.float32) * 0.1
    w2_se = jax.random.normal(ks[2], (C, Cr), dtype=jnp.float32) * 0.1
    w1_dual = jax.random.normal(ks[3], (Cr, C), dtype=jnp.float32) * 0.1
    w2_dual = jax.random.normal(ks[4], (C2, Cr), dtype=jnp.float32) * 0.1
    w3_dual = jax.random.normal(ks[5], (C, C2), dtype=jnp.float32) * 0.1

    out = jax.block_until_ready(
        dual_se_block(x, w1_se, w2_se, w1_dual, w2_dual, w3_dual))

    ref = _reference(x, w1_se, w2_se, w1_dual, w2_dual, w3_dual)
    assert out.shape == (B, C, L)
    assert jnp.allclose(out, ref, atol=1e-5, rtol=1e-5), "mismatch vs reference"

    print("KERNEL_OK")
</pallas_src>

<mosaic_0001>
module attributes {stable_mosaic.version = 11 : i64} {
  func.func @_dual_se_kernel(%arg0: i32, %arg1: memref<2x32x16xf32, #tpu.memory_space<vmem>>, %arg2: memref<32x2xf32, #tpu.memory_space<vmem>>, %arg3: memref<2x32xf32, #tpu.memory_space<vmem>>, %arg4: memref<32x2xf32, #tpu.memory_space<vmem>>, %arg5: memref<2x16xf32, #tpu.memory_space<vmem>>, %arg6: memref<16x32xf32, #tpu.memory_space<vmem>>, %arg7: memref<2x32x16xf32, #tpu.memory_space<vmem>>) attributes {dimension_semantics = [#tpu.dimension_semantics<parallel>], iteration_bounds = array<i64: 1>, scalar_prefetch = 0 : i64, scratch_operands = 0 : i64, tpu.core_type = #tpu.core_type<tc>, window_params = [{transform_indices = @transform_0, window_bounds = array<i64: 2, 32, 16>}, {pipeline_mode = #tpu.pipeline_mode<synchronous>, transform_indices = @transform_1, window_bounds = array<i64: 32, 2>}, {pipeline_mode = #tpu.pipeline_mode<synchronous>, transform_indices = @transform_2, window_bounds = array<i64: 2, 32>}, {pipeline_mode = #tpu.pipeline_mode<synchronous>, transform_indices = @transform_3, window_bounds = array<i64: 32, 2>}, {pipeline_mode = #tpu.pipeline_mode<synchronous>, transform_indices = @transform_4, window_bounds = array<i64: 2, 16>}, {pipeline_mode = #tpu.pipeline_mode<synchronous>, transform_indices = @transform_5, window_bounds = array<i64: 16, 32>}, {transform_indices = @transform_6, window_bounds = array<i64: 2, 32, 16>}]} {
    %c0 = arith.constant 0 : index
    %c0_0 = arith.constant 0 : index
    %c0_1 = arith.constant 0 : index
    %0 = vector.load %arg1[%c0, %c0_0, %c0_1] : memref<2x32x16xf32, #tpu.memory_space<vmem>>, vector<2x32x16xf32>
    %cst = arith.constant dense<0.000000e+00> : vector<2x32xf32>
    %1 = vector.multi_reduction <add>, %0, %cst [2] : vector<2x32x16xf32> to vector<2x32xf32>
    %cst_2 = arith.constant 1.600000e+01 : f32
    %2 = vector.broadcast %cst_2 : f32 to vector<2x32xf32>
    %3 = arith.divf %1, %2 : vector<2x32xf32>
    %c0_3 = arith.constant 0 : index
    %c0_4 = arith.constant 0 : index
    %4 = vector.load %arg2[%c0_3, %c0_4] : memref<32x2xf32, #tpu.memory_space<vmem>>, vector<32x2xf32>
    %cst_5 = arith.constant dense<0.000000e+00> : vector<2x2xf32>
    %5 = tpu.matmul %3, %4, %cst_5 {dimension_numbers = #tpu.dot_dimension_numbers<[1], [0], [0], [1], [0, 0, 1, 1], [], []>} : vector<2x32xf32>, vector<32x2xf32>, vector<2x2xf32> -> vector<2x2xf32>
    %cst_6 = arith.constant 0.000000e+00 : f32
    %6 = vector.broadcast %cst_6 : f32 to vector<2x2xf32>
    %7 = arith.maximumf %5, %6 : vector<2x2xf32>
    %c0_7 = arith.constant 0 : index
    %c0_8 = arith.constant 0 : index
    %8 = vector.load %arg3[%c0_7, %c0_8] : memref<2x32xf32, #tpu.memory_space<vmem>>, vector<2x32xf32>
    %cst_9 = arith.constant dense<0.000000e+00> : vector<2x32xf32>
    %9 = tpu.matmul %7, %8, %cst_9 {dimension_numbers = #tpu.dot_dimension_numbers<[1], [0], [0], [1], [0, 0, 1, 1], [], []>} : vector<2x2xf32>, vector<2x32xf32>, vector<2x32xf32> -> vector<2x32xf32>
    %10 = arith.negf %9 : vector<2x32xf32>
    %11 = math.exp %10 : vector<2x32xf32>
    %cst_10 = arith.constant 1.000000e+00 : f32
    %12 = vector.broadcast %cst_10 : f32 to vector<2x32xf32>
    %13 = arith.addf %12, %11 : vector<2x32xf32>
    %14 = arith.divf %12, %13 : vector<2x32xf32>
    %c0_11 = arith.constant 0 : index
    %c0_12 = arith.constant 0 : index
    %15 = vector.load %arg4[%c0_11, %c0_12] : memref<32x2xf32, #tpu.memory_space<vmem>>, vector<32x2xf32>
    %cst_13 = arith.constant dense<0.000000e+00> : vector<2x2xf32>
    %16 = tpu.matmul %3, %15, %cst_13 {dimension_numbers = #tpu.dot_dimension_numbers<[1], [0], [0], [1], [0, 0, 1, 1], [], []>} : vector<2x32xf32>, vector<32x2xf32>, vector<2x2xf32> -> vector<2x2xf32>
    %cst_14 = arith.constant 0.000000e+00 : f32
    %17 = vector.broadcast %cst_14 : f32 to vector<2x2xf32>
    %18 = arith.maximumf %16, %17 : vector<2x2xf32>
    %c0_15 = arith.constant 0 : index
    %c0_16 = arith.constant 0 : index
    %19 = vector.load %arg5[%c0_15, %c0_16] : memref<2x16xf32, #tpu.memory_space<vmem>>, vector<2x16xf32>
    %cst_17 = arith.constant dense<0.000000e+00> : vector<2x16xf32>
    %20 = tpu.matmul %18, %19, %cst_17 {dimension_numbers = #tpu.dot_dimension_numbers<[1], [0], [0], [1], [0, 0, 1, 1], [], []>} : vector<2x2xf32>, vector<2x16xf32>, vector<2x16xf32> -> vector<2x16xf32>
    %cst_18 = arith.constant 0.000000e+00 : f32
    %21 = vector.broadcast %cst_18 : f32 to vector<2x16xf32>
    %22 = arith.maximumf %20, %21 : vector<2x16xf32>
    %c0_19 = arith.constant 0 : index
    %c0_20 = arith.constant 0 : index
    %23 = vector.load %arg6[%c0_19, %c0_20] : memref<16x32xf32, #tpu.memory_space<vmem>>, vector<16x32xf32>
    %cst_21 = arith.constant dense<0.000000e+00> : vector<2x32xf32>
    %24 = tpu.matmul %22, %23, %cst_21 {dimension_numbers = #tpu.dot_dimension_numbers<[1], [0], [0], [1], [0, 0, 1, 1], [], []>} : vector<2x16xf32>, vector<16x32xf32>, vector<2x32xf32> -> vector<2x32xf32>
    %25 = arith.negf %24 : vector<2x32xf32>
    %26 = math.exp %25 : vector<2x32xf32>
    %cst_22 = arith.constant 1.000000e+00 : f32
    %27 = vector.broadcast %cst_22 : f32 to vector<2x32xf32>
    %28 = arith.addf %27, %26 : vector<2x32xf32>
    %29 = arith.divf %27, %28 : vector<2x32xf32>
    %30 = arith.addf %14, %29 : vector<2x32xf32>
    %31 = vector.shape_cast %30 : vector<2x32xf32> to vector<2x32x1xf32>
    %32 = vector.broadcast %31 : vector<2x32x1xf32> to vector<2x32x16xf32>
    %33 = arith.mulf %0, %32 : vector<2x32x16xf32>
    %c0_23 = arith.constant 0 : index
    %c0_24 = arith.constant 0 : index
    %c0_25 = arith.constant 0 : index
    %34 = vector.load %arg7[%c0_23, %c0_24, %c0_25] : memref<2x32x16xf32, #tpu.memory_space<vmem>>, vector<2x32x16xf32>
    tpu.vector_store %arg7[%c0_23, %c0_24, %c0_25], %33 {strides = array<i32>} : memref<2x32x16xf32, #tpu.memory_space<vmem>>, vector<2x32x16xf32>,
    return
  }
  func.func @transform_0(%arg0: i32) -> (i32, i32, i32) {
    %c0_i32 = arith.constant 0 : i32
    %c0_i32_0 = arith.constant 0 : i32
    %c0_i32_1 = arith.constant 0 : i32
    return %arg0, %c0_i32, %c0_i32_0 : i32, i32, i32
  }
  func.func @transform_1(%arg0: i32) -> (i32, i32) {
    %c0_i32 = arith.constant 0 : i32
    %c0_i32_0 = arith.constant 0 : i32
    %c0_i32_1 = arith.constant 0 : i32
    return %c0_i32, %c0_i32_0 : i32, i32
  }
  func.func @transform_2(%arg0: i32) -> (i32, i32) {
    %c0_i32 = arith.constant 0 : i32
    %c0_i32_0 = arith.constant 0 : i32
    %c0_i32_1 = arith.constant 0 : i32
    return %c0_i32, %c0_i32_0 : i32, i32
  }
  func.func @transform_3(%arg0: i32) -> (i32, i32) {
    %c0_i32 = arith.constant 0 : i32
    %c0_i32_0 = arith.constant 0 : i32
    %c0_i32_1 = arith.constant 0 : i32
    return %c0_i32, %c0_i32_0 : i32, i32
  }
  func.func @transform_4(%arg0: i32) -> (i32, i32) {
    %c0_i32 = arith.constant 0 : i32
    %c0_i32_0 = arith.constant 0 : i32
    %c0_i32_1 = arith.constant 0 : i32
    return %c0_i32, %c0_i32_0 : i32, i32
  }
  func.func @transform_5(%arg0: i32) -> (i32, i32) {
    %c0_i32 = arith.constant 0 : i32
    %c0_i32_0 = arith.constant 0 : i32
    %c0_i32_1 = arith.constant 0 : i32
    return %c0_i32, %c0_i32_0 : i32, i32
  }
  func.func @transform_6(%arg0: i32) -> (i32, i32, i32) {
    %c0_i32 = arith.constant 0 : i32
    %c0_i32_0 = arith.constant 0 : i32
    %c0_i32_1 = arith.constant 0 : i32
    return %arg0, %c0_i32, %c0_i32_0 : i32, i32, i32
  }
}

</mosaic_0001>

<llo_original>
// kernel: tpu_custom_call.1
$region0: #{tpu_custom_call.1}
  #allocation0 [shape = 'u32[]', space=smem, size = 0x4, offset = 0x4, fixed_abs, tag = 'smem constant byte address 0x4 - core index']
  #allocation1 [shape = 'u32[144,128]{1,0:T(1,128)}', space=vmem, size = 0x12000, scoped, tag = 'internal scratch']
  %s0 = inlined_call_operand.vmem [shape: f32[2,32,16], index: 0, kind: input, shape index: {}]
  %s1 = inlined_call_operand.vmem [shape: f32[32,2], index: 1, kind: input, shape index: {}]
  %s2 = inlined_call_operand.vmem [shape: f32[2,32], index: 2, kind: input, shape index: {}]
  %s3 = inlined_call_operand.vmem [shape: f32[32,2], index: 3, kind: input, shape index: {}]
  %s4 = inlined_call_operand.vmem [shape: f32[2,16], index: 4, kind: input, shape index: {}]
  %s5 = inlined_call_operand.vmem [shape: f32[16,32], index: 5, kind: input, shape index: {}]
  %s6 = inlined_call_operand.vmem [shape: f32[2,32,16], index: 6, kind: output, shape index: {}]
  %s7 = sld [smem:[#allocation0]]
  $region34: #{tpu_custom_call.1} parent=0
    _
  %s9 = ssub.s32 1, %s7
  %s10 = scalar_select 0, %s9, %s7
  // Predicated region
  $region2: #{tpu_custom_call.1} parent=0 // pred_check
    _
  $region3: #{tpu_custom_call.1} parent=0 // pred_check_branch
    %12 = sbr.rel (0) target = $region5
  $region4: #{tpu_custom_call.1} parent=0 // pred_region
    _
  $region5: #{tpu_custom_call.1} parent=0 // pred_fallthru
    _
  // Predicated region
  $region6: #{tpu_custom_call.1} parent=0 // pred_check
    _
  $region7: #{tpu_custom_call.1} parent=0 // pred_check_branch
    %14 = sbr.rel (0) target = $region9
  $region8: #{tpu_custom_call.1} parent=0 // pred_region
    _
  $region9: #{tpu_custom_call.1} parent=0 // pred_fallthru
    _
  // Predicated region
  $region10: #{tpu_custom_call.1} parent=0 // pred_check
    _
  $region11: #{tpu_custom_call.1} parent=0 // pred_check_branch
    %16 = sbr.rel (0) target = $region13
  $region12: #{tpu_custom_call.1} parent=0 // pred_region
    _
  $region13: #{tpu_custom_call.1} parent=0 // pred_fallthru
    _
  // Predicated region
  $region14: #{tpu_custom_call.1} parent=0 // pred_check
    _
  $region15: #{tpu_custom_call.1} parent=0 // pred_check_branch
    %18 = sbr.rel (0) target = $region17
  $region16: #{tpu_custom_call.1} parent=0 // pred_region
    _
  $region17: #{tpu_custom_call.1} parent=0 // pred_fallthru
    _
  // Predicated region
  $region18: #{tpu_custom_call.1} parent=0 // pred_check
    _
  $region19: #{tpu_custom_call.1} parent=0 // pred_check_branch
    %20 = sbr.rel (0) target = $region21
  $region20: #{tpu_custom_call.1} parent=0 // pred_region
    _
  $region21: #{tpu_custom_call.1} parent=0 // pred_fallthru
    _
  // Predicated region
  $region22: #{tpu_custom_call.1} parent=0 // pred_check
    _
  $region23: #{tpu_custom_call.1} parent=0 // pred_check_branch
    %22 = sbr.rel (0) target = $region25
  $region24: #{tpu_custom_call.1} parent=0 // pred_region
    _
  $region25: #{tpu_custom_call.1} parent=0 // pred_fallthru
    _
  %v23 = vld [vmem:[%s0] sm:$0xff]
  %v24 = vld [vmem:[%s0 + $0x8] sm:$0xff]
  %v25 = vld [vmem:[%s0 + $0x10] sm:$0xff]
  %v26 = vld [vmem:[%s0 + $0x18] sm:$0xff]
  %v27 = vld [vmem:[%s0 + $0x20] sm:$0xff]
  %v28 = vld [vmem:[%s0 + $0x28] sm:$0xff]
  %v29 = vld [vmem:[%s0 + $0x30] sm:$0xff]
  %v30 = vld [vmem:[%s0 + $0x38] sm:$0xff]
  %vm31 = vcmask 130048
  %v32 = vsel %vm31, %v23, 0.0
  %33 = vadd.xlane.f32.xlu0 %v32
  %v34 = vpop.xlane.xlu0 %33
  %v35 = vsel %vm31, %v24, 0.0
  %36 = vadd.xlane.f32.xlu0 %v35
  %v37 = vpop.xlane.xlu0 %36
  %v38 = vsel %vm31, %v25, 0.0
  %39 = vadd.xlane.f32.xlu0 %v38
  %v40 = vpop.xlane.xlu0 %39
  %v41 = vsel %vm31, %v26, 0.0
  %42 = vadd.xlane.f32.xlu0 %v41
  %v43 = vpop.xlane.xlu0 %42
  %v44 = vsel %vm31, %v27, 0.0
  %45 = vadd.xlane.f32.xlu0 %v44
  %v46 = vpop.xlane.xlu0 %45
  %v47 = vsel %vm31, %v28, 0.0
  %48 = vadd.xlane.f32.xlu0 %v47
  %v49 = vpop.xlane.xlu0 %48
  %v50 = vsel %vm31, %v29, 0.0
  %51 = vadd.xlane.f32.xlu0 %v50
  %v52 = vpop.xlane.xlu0 %51
  %v53 = vsel %vm31, %v30, 0.0
  %54 = vadd.xlane.f32.xlu0 %v53
  %v55 = vpop.xlane.xlu0 %54
  %v56 = vrcp.pop 16.0
  %v57 = vmul.f32 %v34, %v56
  %v58 = vmul.f32 %v37, %v56
  %v59 = vmul.f32 %v40, %v56
  %v60 = vmul.f32 %v43, %v56
  %v61 = vmul.f32 %v46, %v56
  %v62 = vmul.f32 %v49, %v56
  %v63 = vmul.f32 %v52, %v56
  %v64 = vmul.f32 %v55, %v56
  %v65 = vld [vmem:[%s1] sm:$0xff]
  %v66 = vld [vmem:[%s1 + $0x8] sm:$0xff]
  %v67 = vld [vmem:[%s1 + $0x10] sm:$0xff]
  %v68 = vld [vmem:[%s1 + $0x18] sm:$0xff]
  %v77 = vlaneseq
  %v78 = vand.u32 %v77, 127
  %v79 = vlaneseq
  %v80 = vshrl.u32 %v79, 7
  %v81 = vsub.s32 %v78, %v80
  %v82 = vrot.slane %v57, %v81
  %v83 = vadd.s32 %v78, 4294967288
  %v84 = vlaneseq
  %v85 = vshrl.u32 %v84, 7
  %v86 = vsub.s32 %v83, %v85
  %v87 = vrot.slane %v58, %v86
  %vm88 = vcmask 130112
  %v89 = vsel %vm88, %v87, %v82
  %v90 = vadd.s32 %v78, 4294967280
  %v91 = vlaneseq
  %v92 = vshrl.u32 %v91, 7
  %v93 = vsub.s32 %v90, %v92
  %v94 = vrot.slane %v59, %v93
  %vm95 = vcmask 195712
  %v96 = vsel %vm95, %v94, %v89
  %v97 = vadd.s32 %v78, 4294967272
  %v98 = vlaneseq
  %v99 = vshrl.u32 %v98, 7
  %v100 = vsub.s32 %v97, %v99
  %v101 = vrot.slane %v60, %v100
  %vm102 = vcmask 261312
  %v103 = vsel %vm102, %v101, %v96
  %v104 = vlaneseq
  %v105 = vshrl.u32 %v104, 7
  %v106 = vsub.s32 %v78, %v105
  %v107 = vrot.slane %v61, %v106
  %v108 = vlaneseq
  %v109 = vshrl.u32 %v108, 7
  %v110 = vsub.s32 %v83, %v109
  %v111 = vrot.slane %v62, %v110
  %v112 = vsel %vm88, %v111, %v107
  %v113 = vlaneseq
  %v114 = vshrl.u32 %v113, 7
  %v115 = vsub.s32 %v90, %v114
  %v116 = vrot.slane %v63, %v115
  %v117 = vsel %vm95, %v116, %v112
  %v118 = vlaneseq
  %v119 = vshrl.u32 %v118, 7
  %v120 = vsub.s32 %v97, %v119
  %v121 = vrot.slane %v64, %v120
  %v122 = vsel %vm102, %v121, %v117
  %vm123 = vcmask 1041409
  %v124 = vsel %vm123, %v122, %v103
  %vm125 = vcmask 261120
  %v126 = vsel %vm125, %v124, 0
  %128 = vmatprep.subr.mxu0 0.0
  %129 = vmatpush1.msra.mxu0 %v65
  %130 = vmatprep.subr.mxu0 0.0
  %131 = vmatpush1.msra.mxu0 %v66
  %132 = vmatprep.subr.mxu0 0.0
  %133 = vmatpush1.msra.mxu0 %v67
  %134 = vmatprep.subr.mxu0 0.0
  %135 = vmatpush1.msra.mxu0 %v68
  %136 = vmatprep.subr.mxu0 0.0
  %137 = vmatpush1.msra.mxu0 0.0
  %138 = vmatprep.subr.mxu0 0.0
  %139 = vmatpush1.msra.mxu0 0.0
  %140 = vmatprep.subr.mxu0 0.0
  %141 = vmatpush1.msra.mxu0 0.0
  %142 = vmatprep.subr.mxu0 0.0
  %143 = vmatpush1.msra.mxu0 0.0
  %144 = vmatprep.subr.mxu0 0.0
  %145 = vmatpush1.msra.mxu0 0.0
  %146 = vmatprep.subr.mxu0 0.0
  %147 = vmatpush1.msra.mxu0 0.0
  %148 = vmatprep.subr.mxu0 0.0
  %149 = vmatpush1.msra.mxu0 0.0
  %150 = vmatprep.subr.mxu0 0.0
  %151 = vmatpush1.msra.mxu0 0.0
  %152 = vmatprep.subr.mxu0 0.0
  %153 = vmatpush1.msra.mxu0 0.0
  %154 = vmatprep.subr.mxu0 0.0
  %155 = vmatpush1.msra.mxu0 0.0
  %156 = vmatprep.subr.mxu0 0.0
  %157 = vmatpush1.msra.mxu0 0.0
  %158 = vmatprep.subr.mxu0 0.0
  %159 = vmatpush1.msra.mxu0 0.0
  %160 = vmatprep.subr.mxu0 0.0
  %161 = vmatpush1.msra.mxu0 0.0
  %162 = vmatprep.subr.mxu0 0.0
  %163 = vmatpush1.msra.mxu0 0.0
  %164 = vmatprep.subr.mxu0 0.0
  %165 = vmatpush1.msra.mxu0 0.0
  %166 = vmatprep.subr.mxu0 0.0
  %167 = vmatpush1.msra.mxu0 0.0
  %168 = vmatprep.subr.mxu0 0.0
  %169 = vmatpush1.msra.mxu0 0.0
  %170 = vmatprep.subr.mxu0 0.0
  %171 = vmatpush1.msra.mxu0 0.0
  %172 = vmatprep.subr.mxu0 0.0
  %173 = vmatpush1.msra.mxu0 0.0
  %174 = vmatprep.subr.mxu0 0.0
  %175 = vmatpush1.msra.mxu0 0.0
  %176 = vmatprep.subr.mxu0 0.0
  %177 = vmatpush1.msra.mxu0 0.0
  %178 = vmatprep.subr.mxu0 0.0
  %179 = vmatpush1.msra.mxu0 0.0
  %180 = vmatprep.subr.mxu0 0.0
  %181 = vmatpush1.msra.mxu0 0.0
  %182 = vmatprep.subr.mxu0 0.0
  %183 = vmatpush1.msra.mxu0 0.0
  %184 = vmatprep.subr.mxu0 0.0
  %185 = vmatpush1.msra.mxu0 0.0
  %186 = vmatprep.subr.mxu0 0.0
  %187 = vmatpush1.msra.mxu0 0.0
  %188 = vmatprep.subr.mxu0 0.0
  %189 = vmatpush1.msra.mxu0 0.0
  %190 = vmatprep.subr.mxu0 0.0
  %191 = vmatpush1.msra.mxu0 0.0
  %192 = vmatprep.mubr.f32.mxu0 0.0
  %193 = vmatmul.mubr.f32.gmra.mrb[0].mxu0 %v126
  %v194 = vpop.f32.mrb[0].mxu0
  %v195 = vadd.f32 0.0, %v194
  %v196 = vpop.f32.mrb[0].mxu0
  %197 = vdwg.mxu0
  %v198 = vmax.f32 %v195, 0.0
  %v199 = vld [vmem:[%s2] sm:$0x3]
  %vm200 = vcmask 15360
  %v202 = vsel %vm200, %v198, 0
  %vm204 = vcmask 1041408
  %v206 = vsel %vm204, %v199, 0
  %208 = vmatprep.subr.mxu0 0.0
  %209 = vmatpush1.msra.mxu0 %v206
  %210 = vmatprep.subr.mxu0 0.0
  %211 = vmatpush1.msra.mxu0 0.0
  %212 = vmatprep.subr.mxu0 0.0
  %213 = vmatpush1.msra.mxu0 0.0
  %214 = vmatprep.subr.mxu0 0.0
  %215 = vmatpush1.msra.mxu0 0.0
  %216 = vmatprep.subr.mxu0 0.0
  %217 = vmatpush1.msra.mxu0 0.0
  %218 = vmatprep.subr.mxu0 0.0
  %219 = vmatpush1.msra.mxu0 0.0
  %220 = vmatprep.subr.mxu0 0.0
  %221 = vmatpush1.msra.mxu0 0.0
  %222 = vmatprep.subr.mxu0 0.0
  %223 = vmatpush1.msra.mxu0 0.0
  %224 = vmatprep.subr.mxu0 0.0
  %225 = vmatpush1.msra.mxu0 0.0
  %226 = vmatprep.subr.mxu0 0.0
  %227 = vmatpush1.msra.mxu0 0.0
  %228 = vmatprep.subr.mxu0 0.0
  %229 = vmatpush1.msra.mxu0 0.0
  %230 = vmatprep.subr.mxu0 0.0
  %231 = vmatpush1.msra.mxu0 0.0
  %232 = vmatprep.subr.mxu0 0.0
  %233 = vmatpush1.msra.mxu0 0.0
  %234 = vmatprep.subr.mxu0 0.0
  %235 = vmatpush1.msra.mxu0 0.0
  %236 = vmatprep.subr.mxu0 0.0
  %237 = vmatpush1.msra.mxu0 0.0
  %238 = vmatprep.subr.mxu0 0.0
  %239 = vmatpush1.msra.mxu0 0.0
  %240 = vmatprep.subr.mxu0 0.0
  %241 = vmatpush1.msra.mxu0 0.0
  %242 = vmatprep.subr.mxu0 0.0
  %243 = vmatpush1.msra.mxu0 0.0
  %244 = vmatprep.subr.mxu0 0.0
  %245 = vmatpush1.msra.mxu0 0.0
  %246 = vmatprep.subr.mxu0 0.0
  %247 = vmatpush1.msra.mxu0 0.0
  %248 = vmatprep.subr.mxu0 0.0
  %249 = vmatpush1.msra.mxu0 0.0
  %250 = vmatprep.subr.mxu0 0.0
  %251 = vmatpush1.msra.mxu0 0.0
  %252 = vmatprep.subr.mxu0 0.0
  %253 = vmatpush1.msra.mxu0 0.0
  %254 = vmatprep.subr.mxu0 0.0
  %255 = vmatpush1.msra.mxu0 0.0
  %256 = vmatprep.subr.mxu0 0.0
  %257 = vmatpush1.msra.mxu0 0.0
  %258 = vmatprep.subr.mxu0 0.0
  %259 = vmatpush1.msra.mxu0 0.0
  %260 = vmatprep.subr.mxu0 0.0
  %261 = vmatpush1.msra.mxu0 0.0
  %262 = vmatprep.subr.mxu0 0.0
  %263 = vmatpush1.msra.mxu0 0.0
  %264 = vmatprep.subr.mxu0 0.0
  %265 = vmatpush1.msra.mxu0 0.0
  %266 = vmatprep.subr.mxu0 0.0
  %267 = vmatpush1.msra.mxu0 0.0
  %268 = vmatprep.subr.mxu0 0.0
  %269 = vmatpush1.msra.mxu0 0.0
  %270 = vmatprep.subr.mxu0 0.0
  %271 = vmatpush1.msra.mxu0 0.0
  %272 = vmatprep.mubr.f32.mxu0 0.0
  %273 = vmatmul.mubr.f32.gmra.mrb[0].mxu0 %v202
  %v274 = vpop.f32.mrb[0].mxu0
  %v275 = vadd.f32 0.0, %v274
  %v276 = vpop.f32.mrb[0].mxu0
  %277 = vdwg.mxu0
  %v278 = vxor.u32 %v275, 2147483648
  %v279 = vmul.f32 %v278, 1.442695
  %v280 = vpow.pop %v279
  %v281 = vadd.f32 %v280, 1.0
  %v282 = vrcp.pop %v281
  %v283 = vmul.f32 1.0, %v282
  %v284 = vld [vmem:[%s3] sm:$0xff]
  %v285 = vld [vmem:[%s3 + $0x8] sm:$0xff]
  %v286 = vld [vmem:[%s3 + $0x10] sm:$0xff]
  %v287 = vld [vmem:[%s3 + $0x18] sm:$0xff]
  %288 = vmatprep.subr.mxu0 0.0
  %289 = vmatpush1.msra.mxu0 %v284
  %290 = vmatprep.subr.mxu0 0.0
  %291 = vmatpush1.msra.mxu0 %v285
  %292 = vmatprep.subr.mxu0 0.0
  %293 = vmatpush1.msra.mxu0 %v286
  %294 = vmatprep.subr.mxu0 0.0
  %295 = vmatpush1.msra.mxu0 %v287
  %296 = vmatprep.subr.mxu0 0.0
  %297 = vmatpush1.msra.mxu0 0.0
  %298 = vmatprep.subr.mxu0 0.0
  %299 = vmatpush1.msra.mxu0 0.0
  %300 = vmatprep.subr.mxu0 0.0
  %301 = vmatpush1.msra.mxu0 0.0
  %302 = vmatprep.subr.mxu0 0.0
  %303 = vmatpush1.msra.mxu0 0.0
  %304 = vmatprep.subr.mxu0 0.0
  %305 = vmatpush1.msra.mxu0 0.0
  %306 = vmatprep.subr.mxu0 0.0
  %307 = vmatpush1.msra.mxu0 0.0
  %308 = vmatprep.subr.mxu0 0.0
  %309 = vmatpush1.msra.mxu0 0.0
  %310 = vmatprep.subr.mxu0 0.0
  %311 = vmatpush1.msra.mxu0 0.0
  %312 = vmatprep.subr.mxu0 0.0
  %313 = vmatpush1.msra.mxu0 0.0
  %314 = vmatprep.subr.mxu0 0.0
  %315 = vmatpush1.msra.mxu0 0.0
  %316 = vmatprep.subr.mxu0 0.0
  %317 = vmatpush1.msra.mxu0 0.0
  %318 = vmatprep.subr.mxu0 0.0
  %319 = vmatpush1.msra.mxu0 0.0
  %320 = vmatprep.subr.mxu0 0.0
  %321 = vmatpush1.msra.mxu0 0.0
  %322 = vmatprep.subr.mxu0 0.0
  %323 = vmatpush1.msra.mxu0 0.0
  %324 = vmatprep.subr.mxu0 0.0
  %325 = vmatpush1.msra.mxu0 0.0
  %326 = vmatprep.subr.mxu0 0.0
  %327 = vmatpush1.msra.mxu0 0.0
  %328 = vmatprep.subr.mxu0 0.0
  %329 = vmatpush1.msra.mxu0 0.0
  %330 = vmatprep.subr.mxu0 0.0
  %331 = vmatpush1.msra.mxu0 0.0
  %332 = vmatprep.subr.mxu0 0.0
  %333 = vmatpush1.msra.mxu0 0.0
  %334 = vmatprep.subr.mxu0 0.0
  %335 = vmatpush1.msra.mxu0 0.0
  %336 = vmatprep.subr.mxu0 0.0
  %337 = vmatpush1.msra.mxu0 0.0
  %338 = vmatprep.subr.mxu0 0.0
  %339 = vmatpush1.msra.mxu0 0.0
  %340 = vmatprep.subr.mxu0 0.0
  %341 = vmatpush1.msra.mxu0 0.0
  %342 = vmatprep.subr.mxu0 0.0
  %343 = vmatpush1.msra.mxu0 0.0
  %344 = vmatprep.subr.mxu0 0.0
  %345 = vmatpush1.msra.mxu0 0.0
  %346 = vmatprep.subr.mxu0 0.0
  %347 = vmatpush1.msra.mxu0 0.0
  %348 = vmatprep.subr.mxu0 0.0
  %349 = vmatpush1.msra.mxu0 0.0
  %350 = vmatprep.subr.mxu0 0.0
  %351 = vmatpush1.msra.mxu0 0.0
  %352 = vmatprep.mubr.f32.mxu0 0.0
  %353 = vmatmul.mubr.f32.gmra.mrb[0].mxu0 %v126
  %v354 = vpop.f32.mrb[0].mxu0
  %v355 = vadd.f32 0.0, %v354
  %v356 = vpop.f32.mrb[0].mxu0
  %357 = vdwg.mxu0
  %v358 = vmax.f32 %v355, 0.0
  %v359 = vld [vmem:[%s4] sm:$0x3]
  %v361 = vsel %vm200, %v358, 0
  %v364 = vsel %vm204, %v359, 0
  %366 = vmatprep.subr.mxu0 0.0
  %367 = vmatpush1.msra.mxu0 %v364
  %368 = vmatprep.subr.mxu0 0.0
  %369 = vmatpush1.msra.mxu0 0.0
  %370 = vmatprep.subr.mxu0 0.0
  %371 = vmatpush1.msra.mxu0 0.0
  %372 = vmatprep.subr.mxu0 0.0
  %373 = vmatpush1.msra.mxu0 0.0
  %374 = vmatprep.subr.mxu0 0.0
  %375 = vmatpush1.msra.mxu0 0.0
  %376 = vmatprep.subr.mxu0 0.0
  %377 = vmatpush1.msra.mxu0 0.0
  %378 = vmatprep.subr.mxu0 0.0
  %379 = vmatpush1.msra.mxu0 0.0
  %380 = vmatprep.subr.mxu0 0.0
  %381 = vmatpush1.msra.mxu0 0.0
  %382 = vmatprep.subr.mxu0 0.0
  %383 = vmatpush1.msra.mxu0 0.0
  %384 = vmatprep.subr.mxu0 0.0
  %385 = vmatpush1.msra.mxu0 0.0
  %386 = vmatprep.subr.mxu0 0.0
  %387 = vmatpush1.msra.mxu0 0.0
  %388 = vmatprep.subr.mxu0 0.0
  %389 = vmatpush1.msra.mxu0 0.0
  %390 = vmatprep.subr.mxu0 0.0
  %391 = vmatpush1.msra.mxu0 0.0
  %392 = vmatprep.subr.mxu0 0.0
  %393 = vmatpush1.msra.mxu0 0.0
  %394 = vmatprep.subr.mxu0 0.0
  %395 = vmatpush1.msra.mxu0 0.0
  %396 = vmatprep.subr.mxu0 0.0
  %397 = vmatpush1.msra.mxu0 0.0
  %398 = vmatprep.subr.mxu0 0.0
  %399 = vmatpush1.msra.mxu0 0.0
  %400 = vmatprep.subr.mxu0 0.0
  %401 = vmatpush1.msra.mxu0 0.0
  %402 = vmatprep.subr.mxu0 0.0
  %403 = vmatpush1.msra.mxu0 0.0
  %404 = vmatprep.subr.mxu0 0.0
  %405 = vmatpush1.msra.mxu0 0.0
  %406 = vmatprep.subr.mxu0 0.0
  %407 = vmatpush1.msra.mxu0 0.0
  %408 = vmatprep.subr.mxu0 0.0
  %409 = vmatpush1.msra.mxu0 0.0
  %410 = vmatprep.subr.mxu0 0.0
  %411 = vmatpush1.msra.mxu0 0.0
  %412 = vmatprep.subr.mxu0 0.0
  %413 = vmatpush1.msra.mxu0 0.0
  %414 = vmatprep.subr.mxu0 0.0
  %415 = vmatpush1.msra.mxu0 0.0
  %416 = vmatprep.subr.mxu0 0.0
  %417 = vmatpush1.msra.mxu0 0.0
  %418 = vmatprep.subr.mxu0 0.0
  %419 = vmatpush1.msra.mxu0 0.0
  %420 = vmatprep.subr.mxu0 0.0
  %421 = vmatpush1.msra.mxu0 0.0
  %422 = vmatprep.subr.mxu0 0.0
  %423 = vmatpush1.msra.mxu0 0.0
  %424 = vmatprep.subr.mxu0 0.0
  %425 = vmatpush1.msra.mxu0 0.0
  %426 = vmatprep.subr.mxu0 0.0
  %427 = vmatpush1.msra.mxu0 0.0
  %428 = vmatprep.subr.mxu0 0.0
  %429 = vmatpush1.msra.mxu0 0.0
  %430 = vmatprep.mubr.f32.mxu0 0.0
  %431 = vmatmul.mubr.f32.gmra.mrb[0].mxu0 %v361
  %v432 = vpop.f32.mrb[0].mxu0
  %v433 = vadd.f32 0.0, %v432
  %v434 = vpop.f32.mrb[0].mxu0
  %435 = vdwg.mxu0
  %v436 = vmax.f32 %v433, 0.0
  %v437 = vld [vmem:[%s5] sm:$0xff]
  %v438 = vld [vmem:[%s5 + $0x8] sm:$0xff]
  %v440 = vsel %vm31, %v436, 0
  %442 = vmatprep.subr.mxu0 0.0
  %443 = vmatpush1.msra.mxu0 %v437
  %444 = vmatprep.subr.mxu0 0.0
  %445 = vmatpush1.msra.mxu0 %v438
  %446 = vmatprep.subr.mxu0 0.0
  %447 = vmatpush1.msra.mxu0 0.0
  %448 = vmatprep.subr.mxu0 0.0
  %449 = vmatpush1.msra.mxu0 0.0
  %450 = vmatprep.subr.mxu0 0.0
  %451 = vmatpush1.msra.mxu0 0.0
  %452 = vmatprep.subr.mxu0 0.0
  %453 = vmatpush1.msra.mxu0 0.0
  %454 = vmatprep.subr.mxu0 0.0
  %455 = vmatpush1.msra.mxu0 0.0
  %456 = vmatprep.subr.mxu0 0.0
  %457 = vmatpush1.msra.mxu0 0.0
  %458 = vmatprep.subr.mxu0 0.0
  %459 = vmatpush1.msra.mxu0 0.0
  %460 = vmatprep.subr.mxu0 0.0
  %461 = vmatpush1.msra.mxu0 0.0
  %462 = vmatprep.subr.mxu0 0.0
  %463 = vmatpush1.msra.mxu0 0.0
  %464 = vmatprep.subr.mxu0 0.0
  %465 = vmatpush1.msra.mxu0 0.0
  %466 = vmatprep.subr.mxu0 0.0
  %467 = vmatpush1.msra.mxu0 0.0
  %468 = vmatprep.subr.mxu0 0.0
  %469 = vmatpush1.msra.mxu0 0.0
  %470 = vmatprep.subr.mxu0 0.0
  %471 = vmatpush1.msra.mxu0 0.0
  %472 = vmatprep.subr.mxu0 0.0
  %473 = vmatpush1.msra.mxu0 0.0
  %474 = vmatprep.subr.mxu0 0.0
  %475 = vmatpush1.msra.mxu0 0.0
  %476 = vmatprep.subr.mxu0 0.0
  %477 = vmatpush1.msra.mxu0 0.0
  %478 = vmatprep.subr.mxu0 0.0
  %479 = vmatpush1.msra.mxu0 0.0
  %480 = vmatprep.subr.mxu0 0.0
  %481 = vmatpush1.msra.mxu0 0.0
  %482 = vmatprep.subr.mxu0 0.0
  %483 = vmatpush1.msra.mxu0 0.0
  %484 = vmatprep.subr.mxu0 0.0
  %485 = vmatpush1.msra.mxu0 0.0
  %486 = vmatprep.subr.mxu0 0.0
  %487 = vmatpush1.msra.mxu0 0.0
  %488 = vmatprep.subr.mxu0 0.0
  %489 = vmatpush1.msra.mxu0 0.0
  %490 = vmatprep.subr.mxu0 0.0
  %491 = vmatpush1.msra.mxu0 0.0
  %492 = vmatprep.subr.mxu0 0.0
  %493 = vmatpush1.msra.mxu0 0.0
  %494 = vmatprep.subr.mxu0 0.0
  %495 = vmatpush1.msra.mxu0 0.0
  %496 = vmatprep.subr.mxu0 0.0
  %497 = vmatpush1.msra.mxu0 0.0
  %498 = vmatprep.subr.mxu0 0.0
  %499 = vmatpush1.msra.mxu0 0.0
  %500 = vmatprep.subr.mxu0 0.0
  %501 = vmatpush1.msra.mxu0 0.0
  %502 = vmatprep.subr.mxu0 0.0
  %503 = vmatpush1.msra.mxu0 0.0
  %504 = vmatprep.subr.mxu0 0.0
  %505 = vmatpush1.msra.mxu0 0.0
  %506 = vmatprep.mubr.f32.mxu0 0.0
  %507 = vmatmul.mubr.f32.gmra.mrb[0].mxu0 %v440
  %v508 = vpop.f32.mrb[0].mxu0
  %v509 = vadd.f32 0.0, %v508
  %v510 = vpop.f32.mrb[0].mxu0
  %511 = vdwg.mxu0
  %v512 = vxor.u32 %v509, 2147483648
  %v513 = vmul.f32 %v512, 1.442695
  %v514 = vpow.pop %v513
  %v515 = vadd.f32 %v514, 1.0
  %v516 = vrcp.pop %v515
  %v517 = vmul.f32 1.0, %v516
  %v518 = vadd.f32 %v283, %v517
  %v519 = vlaneseq
  %v520 = vshrl.u32 %v519, 7
  %v521 = vsub.s32 0, %v520
  %v522 = vrot.slane %v518, %v521
  %524 = vbcast.lane.b32.xlu0 %v522, 256
  %v525 = vpop.permute.xlu0 %524
  %s527 = sor.u32 256, 8
  %528 = vbcast.lane.b32.xlu0 %v522, %s527
  %v529 = vpop.permute.xlu0 %528
  %s531 = sor.u32 256, 16
  %532 = vbcast.lane.b32.xlu0 %v522, %s531
  %v533 = vpop.permute.xlu0 %532
  %s535 = sor.u32 256, 24
  %536 = vbcast.lane.b32.xlu0 %v522, %s535
  %v537 = vpop.permute.xlu0 %536
  %v538 = vlaneseq
  %v539 = vshrl.u32 %v538, 7
  %v540 = vsub.s32 1, %v539
  %v541 = vrot.slane %v518, %v540
  %543 = vbcast.lane.b32.xlu0 %v541, 256
  %v544 = vpop.permute.xlu0 %543
  %s546 = sor.u32 256, 8
  %547 = vbcast.lane.b32.xlu0 %v541, %s546
  %v548 = vpop.permute.xlu0 %547
  %s550 = sor.u32 256, 16
  %551 = vbcast.lane.b32.xlu0 %v541, %s550
  %v552 = vpop.permute.xlu0 %551
  %s554 = sor.u32 256, 24
  %555 = vbcast.lane.b32.xlu0 %v541, %s554
  %v556 = vpop.permute.xlu0 %555
  %v557 = vmul.f32 %v23, %v525
  %v558 = vmul.f32 %v24, %v529
  %v559 = vmul.f32 %v25, %v533
  %v560 = vmul.f32 %v26, %v537
  %v561 = vmul.f32 %v27, %v544
  %v562 = vmul.f32 %v28, %v548
  %v563 = vmul.f32 %v29, %v552
  %v564 = vmul.f32 %v30, %v556
  %565 = vst.msk [vmem:[%s6] sm:$0xff] %vm31, %v557
  %566 = vst.msk [vmem:[%s6 + $0x8] sm:$0xff] %vm31, %v558
  %567 = vst.msk [vmem:[%s6 + $0x10] sm:$0xff] %vm31, %v559
  %568 = vst.msk [vmem:[%s6 + $0x18] sm:$0xff] %vm31, %v560
  %569 = vst.msk [vmem:[%s6 + $0x20] sm:$0xff] %vm31, %v561
  %570 = vst.msk [vmem:[%s6 + $0x28] sm:$0xff] %vm31, %v562
  %571 = vst.msk [vmem:[%s6 + $0x30] sm:$0xff] %vm31, %v563
  %572 = vst.msk [vmem:[%s6 + $0x38] sm:$0xff] %vm31, %v564
  // Predicated region
  $region26: #{tpu_custom_call.1} parent=0 // pred_check
    _
  $region27: #{tpu_custom_call.1} parent=0 // pred_check_branch
    %574 = sbr.rel (0) target = $region29
  $region28: #{tpu_custom_call.1} parent=0 // pred_region
    _
  $region29: #{tpu_custom_call.1} parent=0 // pred_fallthru
    _
  // Predicated region
  $region30: #{tpu_custom_call.1} parent=0 // pred_check
    _
  $region31: #{tpu_custom_call.1} parent=0 // pred_check_branch
    %576 = sbr.rel (0) target = $region33
  $region32: #{tpu_custom_call.1} parent=0 // pred_region
    _
  $region33: #{tpu_custom_call.1} parent=0 // pred_fallthru
    _

</llo_original>
